<compile_context>
chip_gen: v5e
topology: v5e:2x2
jax: 0.10.0
libtpu: 0.0.40
codegen_flags: <defaults>
</compile_context>

<pallas_src>
import functools

import jax
import jax.numpy as jnp
from jax import lax
from jax.experimental import pallas as pl
from jax.experimental.pallas import tpu as pltpu


def _round_up(x, m):
    return ((x + m - 1) // m) * m


def _feat_kernel(x_ref, w_ref, xw_ref):
    """Prologue: XW_ext = X @ W_ext (bf16 MXU inputs, f32 accumulate, bf16 out)."""
    xw_ref[...] = jnp.dot(
        x_ref[...].astype(jnp.bfloat16), w_ref[...],
        preferred_element_type=jnp.float32,
    ).astype(xw_ref.dtype)


def _conv_kernel(a_ref, xw_ref, bias_ref, out_ref, acc_ref, *, n_valid, tk, mask_k):
    """Grid step (i, k): acc += A[i-tile, k-tile] @ XW_ext[k-tile]; finalize at last k."""
    k = pl.program_id(1)

    @pl.when(k == 0)
    def _():
        acc_ref[...] = jnp.zeros_like(acc_ref)

    # In-kernel cast keeps the HBM A stream single-read (no standalone cast pass).
    a = a_ref[...].astype(jnp.bfloat16)
    if mask_k:  # static: only emitted when N % tk != 0 (ragged last K block)
        col = k * tk + lax.broadcasted_iota(jnp.int32, a.shape, 1)
        a = jnp.where(col < n_valid, a, jnp.zeros_like(a))

    acc_ref[...] += jnp.dot(a, xw_ref[...], preferred_element_type=jnp.float32)

    @pl.when(k == pl.num_programs(1) - 1)
    def _():
        out_ref[...] = acc_ref[...] + bias_ref[...]


def ifgcn_forward(a_hat, x, params, *, tn=256, tk=512, tm=256):
    """Returns (y, s, z) matching IFGCN.forward for the GCN body."""
    N, F = x.shape
    nhid = params["w_gnn"].shape[1]

    # ---- plain-JAX glue: fold the linear heads into extra feature columns ----
    # (exact: the heads are linear, so A@(X@W_gnn@W_cls) + b_gnn@W_cls + b_cls == y)
    w_y = params["w_gnn"] @ params["w_cls"]                              # (F, 1)
    w_s = params["w_est"] @ params["w_fc_est"]                           # (F, 1)
    b_y = params["b_gnn"] @ params["w_cls"] + params["b_cls"]            # (1, 1)
    b_s = params["b_est"] @ params["w_fc_est"] + params["b_fc_est"]      # (1, 1)

    # Lane-dense slab layout: [z (nhid) | y (1) | s (1) | zero pad] -> 128 lanes,
    # so every per-step output store is a full-width unmasked vst.
    hext = _round_up(nhid + 2, 128)
    w_ext = jnp.zeros((F, hext), jnp.float32)
    w_ext = w_ext.at[:, :nhid].set(params["w_gnn"])
    w_ext = w_ext.at[:, nhid:nhid + 1].set(w_y)
    w_ext = w_ext.at[:, nhid + 1:nhid + 2].set(w_s)
    w_ext = w_ext.astype(jnp.bfloat16)

    bias_ext = jnp.zeros((1, hext), jnp.float32)
    bias_ext = bias_ext.at[:, :nhid].set(params["b_gnn"])
    bias_ext = bias_ext.at[:, nhid:nhid + 1].set(b_y)
    bias_ext = bias_ext.at[:, nhid + 1:nhid + 2].set(b_s)

    # ---- tile sizing (respect the (8,128) tiling constraints) ----
    tm = min(_round_up(tm, 8), _round_up(N, 8))
    tn = min(_round_up(tn, 8), _round_up(N, 8))
    tk = N if N <= tk else tk            # tk must be a multiple of 128 or == N
    assert tk == N or tk % 128 == 0, "tk must be a multiple of 128 (or >= N)"
    mask_k = (N % tk) != 0

    # ---- prologue: XW_ext = X @ W_ext, computed exactly once over the nodes ----
    xw = pl.pallas_call(
        _feat_kernel,
        grid=(pl.cdiv(N, tm),),
        in_specs=[pl.BlockSpec((tm, F), lambda i: (i, 0)),
                  pl.BlockSpec((F, hext), lambda i: (0, 0))],
        out_specs=pl.BlockSpec((tm, hext), lambda i: (i, 0)),
        out_shape=jax.ShapeDtypeStruct((N, hext), jnp.bfloat16),
        compiler_params=pltpu.CompilerParams(dimension_semantics=("parallel",)),
    )(x, w_ext)

    # ---- explicit VMEM budget (double-buffered A + XW blocks, out slab, acc) ----
    vmem_bytes = (2 * tn * tk * a_hat.dtype.itemsize   # A tile, double-buffered
                  + 2 * tk * hext * 2                  # XW_ext K block (bf16), x2
                  + 2 * tn * hext * 4                  # output slab, x2
                  + tn * hext * 4                      # f32 accumulator scratch
                  + 2 * hext * 4)                      # bias
    vmem_limit = min(max(32 << 20, int(1.25 * vmem_bytes) + (2 << 20)), 128 << 20)

    # ---- main kernel: slab = A_hat @ XW_ext + bias_ext, K-tiled contraction ----
    slab = pl.pallas_call(
        functools.partial(_conv_kernel, n_valid=N, tk=tk, mask_k=mask_k),
        grid=(pl.cdiv(N, tn), pl.cdiv(N, tk)),
        in_specs=[pl.BlockSpec((tn, tk), lambda i, k: (i, k)),      # A row/K tile (f32)
                  pl.BlockSpec((tk, hext), lambda i, k: (k, 0)),    # XW_ext K block (bf16)
                  pl.BlockSpec((1, hext), lambda i, k: (0, 0))],    # folded bias
        out_specs=pl.BlockSpec((tn, hext), lambda i, k: (i, 0)),    # [z | y | s | pad]
        out_shape=jax.ShapeDtypeStruct((N, hext), jnp.float32),
        scratch_shapes=[pltpu.VMEM((tn, hext), jnp.float32)],
        compiler_params=pltpu.CompilerParams(
            dimension_semantics=("parallel", "arbitrary"),
            vmem_limit_bytes=vmem_limit),
    )(a_hat, xw, bias_ext)

    z = slab[:, :nhid]
    y = slab[:, nhid:nhid + 1]
    s = slab[:, nhid + 1:nhid + 2]
    return y, s, z


def _reference(a_hat, x, p):
    hp = lax.Precision.HIGHEST
    h_e = jnp.dot(a_hat, jnp.dot(x, p["w_est"], precision=hp), precision=hp) + p["b_est"]
    s = jnp.dot(h_e, p["w_fc_est"], precision=hp) + p["b_fc_est"]
    z = jnp.dot(a_hat, jnp.dot(x, p["w_gnn"], precision=hp), precision=hp) + p["b_gnn"]
    y = jnp.dot(z, p["w_cls"], precision=hp) + p["b_cls"]
    return y, s, z


if __name__ == "__main__":
    # Small shapes consistent with the module:
    #   N nodes = 256, nfeat = 64, estimator hidden (args.hidden) = 16,
    #   GNN hidden (args.num_hidden) = 32.
    N, NFEAT, HEST, NHID = 256, 64, 16, 32

    key = jax.random.PRNGKey(0)
    k_x, k_a, k1, k2, k3, k4, k5, k6 = jax.random.split(key, 8)

    # Node features.
    x = jax.random.normal(k_x, (N, NFEAT), dtype=jnp.float32)

    # Sparse random graph -> symmetric adjacency with self loops -> sym-normalize.
    logits = jax.random.uniform(k_a, (N, N))
    adj = (logits < 0.05).astype(jnp.float32)
    adj = jnp.maximum(adj, adj.T)
    adj = adj + jnp.eye(N, dtype=jnp.float32)
    deg = jnp.sum(adj, axis=1)
    d_inv_sqrt = 1.0 / jnp.sqrt(deg)
    a_hat = adj * d_inv_sqrt[:, None] * d_inv_sqrt[None, :]

    # Deterministic parameter init (synthetic, not a checkpoint load).
    def init(k, shape, scale=0.1):
        return (scale * jax.random.normal(k, shape)).astype(jnp.float32)

    params = {
        "w_est":    init(k1, (NFEAT, HEST)),
        "b_est":    jnp.zeros((1, HEST), jnp.float32),
        "w_fc_est": init(k2, (HEST, 1)),
        "b_fc_est": jnp.zeros((1, 1), jnp.float32),
        "w_gnn":    init(k3, (NFEAT, NHID)),
        "b_gnn":    init(k4, (1, NHID), 0.01),
        "w_cls":    init(k5, (NHID, 1)),
        "b_cls":    init(k6, (1, 1), 0.01),
    }

    # tn=tk=128 at N=256 exercises the (row x K) grid, accumulator init/finalize
    # and the resident-output path; production defaults are tn=256 / tk=512.
    fwd = jax.jit(functools.partial(ifgcn_forward, tn=128, tk=128, tm=128))
    y, s, z = jax.block_until_ready(fwd(a_hat, x, params))

    y_ref, s_ref, z_ref = _reference(a_hat, x, params)
    assert y.shape == (N, 1) and s.shape == (N, 1) and z.shape == (N, NHID)
    # Tolerance accounts for the bf16 A stream / bf16 XW_ext feed of the MXU
    # (f32 accumulation throughout).
    assert jnp.allclose(y, y_ref, atol=3e-2, rtol=3e-2)
    assert jnp.allclose(s, s_ref, atol=3e-2, rtol=3e-2)
    assert jnp.allclose(z, z_ref, atol=3e-2, rtol=3e-2)

    print("KERNEL_OK")
</pallas_src>

<mosaic_0001>
module attributes {stable_mosaic.version = 11 : i64} {
  func.func @_feat_kernel(%arg0: i32, %arg1: memref<128x64xf32, #tpu.memory_space<vmem>>, %arg2: memref<64x128xbf16, #tpu.memory_space<vmem>>, %arg3: memref<128x128xbf16, #tpu.memory_space<vmem>>) attributes {dimension_semantics = [#tpu.dimension_semantics<parallel>], iteration_bounds = array<i64: 2>, scalar_prefetch = 0 : i64, scratch_operands = 0 : i64, tpu.core_type = #tpu.core_type<tc>, window_params = [{transform_indices = @transform_0, window_bounds = array<i64: 128, 64>}, {pipeline_mode = #tpu.pipeline_mode<synchronous>, transform_indices = @transform_1, window_bounds = array<i64: 64, 128>}, {transform_indices = @transform_2, window_bounds = array<i64: 128, 128>}]} {
    %c0 = arith.constant 0 : index
    %c0_0 = arith.constant 0 : index
    %0 = vector.load %arg1[%c0, %c0_0] : memref<128x64xf32, #tpu.memory_space<vmem>>, vector<128x64xf32>
    %1 = arith.truncf %0 : vector<128x64xf32> to vector<128x64xbf16>
    %c0_1 = arith.constant 0 : index
    %c0_2 = arith.constant 0 : index
    %2 = vector.load %arg2[%c0_1, %c0_2] : memref<64x128xbf16, #tpu.memory_space<vmem>>, vector<64x128xbf16>
    %cst = arith.constant dense<0.000000e+00> : vector<128x128xf32>
    %3 = tpu.matmul %1, %2, %cst {dimension_numbers = #tpu.dot_dimension_numbers<[1], [0], [0], [1], [0, 0, 1, 1], [], []>} : vector<128x64xbf16>, vector<64x128xbf16>, vector<128x128xf32> -> vector<128x128xf32>
    %4 = arith.truncf %3 : vector<128x128xf32> to vector<128x128xbf16>
    %c0_3 = arith.constant 0 : index
    %c0_4 = arith.constant 0 : index
    %5 = vector.load %arg3[%c0_3, %c0_4] : memref<128x128xbf16, #tpu.memory_space<vmem>>, vector<128x128xbf16>
    tpu.vector_store %arg3[%c0_3, %c0_4], %4 {strides = array<i32>} : memref<128x128xbf16, #tpu.memory_space<vmem>>, vector<128x128xbf16>,
    return
  }
  func.func @transform_0(%arg0: i32) -> (i32, i32) {
    %c0_i32 = arith.constant 0 : i32
    %c0_i32_0 = arith.constant 0 : i32
    return %arg0, %c0_i32 : i32, i32
  }
  func.func @transform_1(%arg0: i32) -> (i32, i32) {
    %c0_i32 = arith.constant 0 : i32
    %c0_i32_0 = arith.constant 0 : i32
    %c0_i32_1 = arith.constant 0 : i32
    return %c0_i32, %c0_i32_0 : i32, i32
  }
  func.func @transform_2(%arg0: i32) -> (i32, i32) {
    %c0_i32 = arith.constant 0 : i32
    %c0_i32_0 = arith.constant 0 : i32
    return %arg0, %c0_i32 : i32, i32
  }
}

module attributes {stable_mosaic.version = 11 : i64} {
  func.func @_conv_kernel(%arg0: i32, %arg1: i32, %arg2: memref<128x128xf32, #tpu.memory_space<vmem>>, %arg3: memref<128x128xbf16, #tpu.memory_space<vmem>>, %arg4: memref<1x128xf32, #tpu.memory_space<vmem>>, %arg5: memref<128x128xf32, #tpu.memory_space<vmem>>, %arg6: memref<128x128xf32, #tpu.memory_space<vmem>>) attributes {dimension_semantics = [#tpu.dimension_semantics<parallel>, #tpu.dimension_semantics<arbitrary>], iteration_bounds = array<i64: 2, 2>, scalar_prefetch = 0 : i64, scratch_operands = 1 : i64, tpu.core_type = #tpu.core_type<tc>, window_params = [{transform_indices = @transform_0, window_bounds = array<i64: 128, 128>}, {transform_indices = @transform_1, window_bounds = array<i64: 128, 128>}, {pipeline_mode = #tpu.pipeline_mode<synchronous>, transform_indices = @transform_2, window_bounds = array<i64: 1, 128>}, {transform_indices = @transform_3, window_bounds = array<i64: 128, 128>}]} {
    %c0_i32 = arith.constant 0 : i32
    %0 = arith.cmpi eq, %arg1, %c0_i32 : i32
    %1 = arith.extui %0 : i1 to i32
    %c0_i32_0 = arith.constant 0 : i32
    %2 = arith.cmpi ne, %1, %c0_i32_0 : i32
    scf.if %2 {
      %cst_9 = arith.constant 0.000000e+00 : f32
      %13 = vector.broadcast %cst_9 : f32 to vector<128x128xf32>
      %c0_10 = arith.constant 0 : index
      %c0_11 = arith.constant 0 : index
      %14 = vector.load %arg6[%c0_10, %c0_11] : memref<128x128xf32, #tpu.memory_space<vmem>>, vector<128x128xf32>
      tpu.vector_store %arg6[%c0_10, %c0_11], %13 {strides = array<i32>} : memref<128x128xf32, #tpu.memory_space<vmem>>, vector<128x128xf32>,
    } else {
    }
    %c0 = arith.constant 0 : index
    %c0_1 = arith.constant 0 : index
    %3 = vector.load %arg2[%c0, %c0_1] : memref<128x128xf32, #tpu.memory_space<vmem>>, vector<128x128xf32>
    %4 = arith.truncf %3 : vector<128x128xf32> to vector<128x128xbf16>
    %c0_2 = arith.constant 0 : index
    %c0_3 = arith.constant 0 : index
    %5 = vector.load %arg6[%c0_2, %c0_3] : memref<128x128xf32, #tpu.memory_space<vmem>>, vector<128x128xf32>
    %c0_4 = arith.constant 0 : index
    %c0_5 = arith.constant 0 : index
    %6 = vector.load %arg3[%c0_4, %c0_5] : memref<128x128xbf16, #tpu.memory_space<vmem>>, vector<128x128xbf16>
    %cst = arith.constant dense<0.000000e+00> : vector<128x128xf32>
    %7 = tpu.matmul %4, %6, %cst {dimension_numbers = #tpu.dot_dimension_numbers<[1], [0], [0], [1], [0, 0, 1, 1], [], []>} : vector<128x128xbf16>, vector<128x128xbf16>, vector<128x128xf32> -> vector<128x128xf32>
    %8 = arith.addf %5, %7 : vector<128x128xf32>
    %c0_6 = arith.constant 0 : index
    %c0_7 = arith.constant 0 : index
    %9 = vector.load %arg6[%c0_6, %c0_7] : memref<128x128xf32, #tpu.memory_space<vmem>>, vector<128x128xf32>
    tpu.vector_store %arg6[%c0_6, %c0_7], %8 {strides = array<i32>} : memref<128x128xf32, #tpu.memory_space<vmem>>, vector<128x128xf32>,
    %c1_i32 = arith.constant 1 : i32
    %10 = arith.cmpi eq, %arg1, %c1_i32 : i32
    %11 = arith.extui %10 : i1 to i32
    %c0_i32_8 = arith.constant 0 : i32
    %12 = arith.cmpi ne, %11, %c0_i32_8 : i32
    scf.if %12 {
      %c0_9 = arith.constant 0 : index
      %c0_10 = arith.constant 0 : index
      %13 = vector.load %arg6[%c0_9, %c0_10] : memref<128x128xf32, #tpu.memory_space<vmem>>, vector<128x128xf32>
      %c0_11 = arith.constant 0 : index
      %c0_12 = arith.constant 0 : index
      %14 = vector.load %arg4[%c0_11, %c0_12] : memref<1x128xf32, #tpu.memory_space<vmem>>, vector<1x128xf32>
      %15 = vector.broadcast %14 : vector<1x128xf32> to vector<128x128xf32>
      %16 = arith.addf %13, %15 : vector<128x128xf32>
      %c0_13 = arith.constant 0 : index
      %c0_14 = arith.constant 0 : index
      %17 = vector.load %arg5[%c0_13, %c0_14] : memref<128x128xf32, #tpu.memory_space<vmem>>, vector<128x128xf32>
      tpu.vector_store %arg5[%c0_13, %c0_14], %16 {strides = array<i32>} : memref<128x128xf32, #tpu.memory_space<vmem>>, vector<128x128xf32>,
    } else {
    }
    return
  }
  func.func @transform_0(%arg0: i32, %arg1: i32) -> (i32, i32) {
    %c0_i32 = arith.constant 0 : i32
    return %arg0, %arg1 : i32, i32
  }
  func.func @transform_1(%arg0: i32, %arg1: i32) -> (i32, i32) {
    %c0_i32 = arith.constant 0 : i32
    %c0_i32_0 = arith.constant 0 : i32
    return %arg1, %c0_i32 : i32, i32
  }
  func.func @transform_2(%arg0: i32, %arg1: i32) -> (i32, i32) {
    %c0_i32 = arith.constant 0 : i32
    %c0_i32_0 = arith.constant 0 : i32
    %c0_i32_1 = arith.constant 0 : i32
    return %c0_i32, %c0_i32_0 : i32, i32
  }
  func.func @transform_3(%arg0: i32, %arg1: i32) -> (i32, i32) {
    %c0_i32 = arith.constant 0 : i32
    %c0_i32_0 = arith.constant 0 : i32
    return %arg0, %c0_i32 : i32, i32
  }
}

</mosaic_0001>

<llo_original>
// kernel: ifgcn_forward.2
$region0: #{ifgcn_forward.2}
  #allocation0 [shape = 'u32[]', space=smem, size = 0x4, offset = 0x4, fixed_abs, tag = 'smem constant byte address 0x4 - core index']
  #allocation1 [shape = 'u32[72,128]{1,0:T(1,128)}', space=vmem, size = 0x9000, scoped, tag = 'internal scratch']
  %s0 = inlined_call_operand.vmem [shape: f32[256,64], index: 0, kind: input, shape index: {}]
  %s1 = inlined_call_operand.vmem [shape: bf16[64,128], index: 1, kind: input, shape index: {}]
  %s2 = inlined_call_operand.vmem [shape: bf16[256,128], index: 2, kind: output, shape index: {}]
  %s3 = sld [smem:[#allocation0]]
  $region41: #{ifgcn_forward.2} parent=0
    _
  %s5 = ssub.s32 1, %s3
  %s6 = scalar_select 0, %s5, %s3
  loop: start=0, step=1, limit=4
  $region2: #{ifgcn_forward.2} parent=0 // loop_pre_header
    _
  $region3: #{ifgcn_forward.2} parent=0 // loop_header
    %s8 = sphi 0, %s12
    %p9 = scmp.ge.s32.totalorder %s8, 4
    %s18 = sphi 0, %s20
    %s21 = sphi 0, %s18
    %s22 = sphi 0, %s21
    %s38 = sphi 0, %s22
    %s42 = sphi 0, %s42
    %s44 = sphi 0, %s42
    %s45 = sphi 0, %s44
    %s59 = sphi 0, %s45
    %s65 = sphi 0, %s67
    %s68 = sphi 0, %s65
    %s69 = sphi 0, %s68
    %s85 = sphi 0, %s69
  $region4: #{ifgcn_forward.2} parent=0 // loop_header_branch
    %11 = sbr.rel (%p9) target = $region8
  $region5: #{ifgcn_forward.2} parent=0 // loop_body
    %s13 = ssub.s32 %s8, 1
    %s14 = ssub.s32 %s8, 2
    %s15 = sadd.s32 %s8, 1
    %s16 = ssub.s32 %s8, %s15
    %p17 = scmp.eq.s32.totalorder %s16, 0
    %s19 = sadd.s32 %s18, 1
    %s20 = scalar_select %p17, %s18, %s19
    %p23 = pneg %p17
    %p24 = scmp.eq.s32.totalorder %s8, 1
    %p25 = por %p23, %p24
    %p26 = scmp.ne.s32.totalorder %s18, %s21
    %p27 = scmp.eq.s32.totalorder %s8, 0
    %p28 = por %p26, %p27
    %p29 = scmp.ne.s32.totalorder %s18, %s21
    %p30 = scmp.eq.s32.totalorder %s13, 1
    %p31 = por %p29, %p30
    %p32 = scmp.ne.s32.totalorder %s21, %s22
    %p33 = scmp.eq.s32.totalorder %s13, 0
    %p34 = por %p32, %p33
    %p35 = scmp.ne.s32.totalorder %s21, %s22
    %p36 = scmp.eq.s32.totalorder %s14, 1
    %p37 = por %p35, %p36
    %p39 = scmp.ne.s32.totalorder %s22, %s38
    %p40 = scmp.eq.s32.totalorder %s14, 0
    %p41 = por %p39, %p40
    %s43 = sadd.s32 %s42, 1
    %p46 = scmp.eq.s32.totalorder %s8, 1
    %p47 = scmp.ne.s32.totalorder %s42, %s44
    %p48 = scmp.eq.s32.totalorder %s8, 0
    %p49 = por %p47, %p48
    %p50 = scmp.ne.s32.totalorder %s42, %s44
    %p51 = scmp.eq.s32.totalorder %s13, 1
    %p52 = por %p50, %p51
    %p53 = scmp.ne.s32.totalorder %s44, %s45
    %p54 = scmp.eq.s32.totalorder %s13, 0
    %p55 = por %p53, %p54
    %p56 = scmp.ne.s32.totalorder %s44, %s45
    %p57 = scmp.eq.s32.totalorder %s14, 1
    %p58 = por %p56, %p57
    %p60 = scmp.ne.s32.totalorder %s45, %s59
    %p61 = scmp.eq.s32.totalorder %s14, 0
    %p62 = por %p60, %p61
    %s63 = ssub.s32 %s8, %s15
    %p64 = scmp.eq.s32.totalorder %s63, 0
    %s66 = sadd.s32 %s65, 1
    %s67 = scalar_select %p64, %s65, %s66
    %p70 = pneg %p64
    %p71 = scmp.eq.s32.totalorder %s8, 1
    %p72 = por %p70, %p71
    %p73 = scmp.ne.s32.totalorder %s65, %s68
    %p74 = scmp.eq.s32.totalorder %s8, 0
    %p75 = por %p73, %p74
    %p76 = scmp.ne.s32.totalorder %s65, %s68
    %p77 = scmp.eq.s32.totalorder %s13, 1
    %p78 = por %p76, %p77
    %p79 = scmp.ne.s32.totalorder %s68, %s69
    %p80 = scmp.eq.s32.totalorder %s13, 0
    %p81 = por %p79, %p80
    %p82 = scmp.ne.s32.totalorder %s68, %s69
    %p83 = scmp.eq.s32.totalorder %s14, 1
    %p84 = por %p82, %p83
    %p86 = scmp.ne.s32.totalorder %s69, %s85
    %p87 = scmp.eq.s32.totalorder %s14, 0
    %p88 = por %p86, %p87
    %p89 = scmp.le.s32.totalorder 1, %s8
    %p90 = scmp.lt.s32.totalorder %s8, 3
    %p91 = pnand %p89, %p90
    %p92 = pneg %p91
    // Predicated region
    $region9: #{ifgcn_forward.2} parent=5 // pred_check
      _
    $region10: #{ifgcn_forward.2} parent=5 // pred_check_branch
      %94 = sbr.rel (%p91) target = $region12
    $region11: #{ifgcn_forward.2} parent=5 // pred_region
      %s95 = ssub.s32 %s8, 1
      // Predicated region
      $region13: #{ifgcn_forward.2} parent=11 // pred_check
        %p96 = pneg %p55
      $region14: #{ifgcn_forward.2} parent=11 // pred_check_branch
        %98 = sbr.rel (%p96) target = $region16
      $region15: #{ifgcn_forward.2} parent=11 // pred_region
        _
      $region16: #{ifgcn_forward.2} parent=11 // pred_fallthru
        _
    $region12: #{ifgcn_forward.2} parent=5 // pred_fallthru
      _
    %p99 = scmp.lt.s32.totalorder %s8, 2
    // Predicated region
    $region17: #{ifgcn_forward.2} parent=5 // pred_check
      %p100 = pneg %p99
    $region18: #{ifgcn_forward.2} parent=5 // pred_check_branch
      %102 = sbr.rel (%p100) target = $region20
    $region19: #{ifgcn_forward.2} parent=5 // pred_region
      // Predicated region
      $region21: #{ifgcn_forward.2} parent=19 // pred_check
        %p103 = pneg %p28
      $region22: #{ifgcn_forward.2} parent=19 // pred_check_branch
        %105 = sbr.rel (%p103) target = $region24
      $region23: #{ifgcn_forward.2} parent=19 // pred_region
        %s106 = smul.u32 16, %s8
        %p107 = scmp.lt.s32.totalorder %s106, 31
        %s108 = scalar_select %p107, %s106, 31
        %s109 = smul.addr %s108, 8
        %s110 = scalar_lea.vmem %s0, %s109
        %s111 = smul.u32 16, %s8
      $region24: #{ifgcn_forward.2} parent=19 // pred_fallthru
        _
    $region20: #{ifgcn_forward.2} parent=5 // pred_fallthru
      _
    %p112 = scmp.le.s32.totalorder 1, %s8
    %p113 = scmp.lt.s32.totalorder %s8, 3
    %p114 = pnand %p112, %p113
    %p115 = pneg %p114
    // Predicated region
    $region25: #{ifgcn_forward.2} parent=5 // pred_check
      _
    $region26: #{ifgcn_forward.2} parent=5 // pred_check_branch
      %117 = sbr.rel (%p114) target = $region28
    $region27: #{ifgcn_forward.2} parent=5 // pred_region
      %s118 = ssub.s32 %s8, 1
      %s119 = smul.u32 16, %s13
      %p120 = scmp.lt.s32.totalorder %s119, 31
      %s121 = scalar_select %p120, %s119, 31
      %s122 = smul.addr %s121, 8
      %s123 = scalar_lea.vmem %s0, %s122
      %p124 = pneg %p34
      %p125 = pneg %p31
      %p126 = pneg %p55
      %p127 = pneg %p52
      %p128 = pneg %p81
      %p129 = pneg %p78
      %s130 = smul.u32 16, %s13
      %p131 = scmp.lt.s32.totalorder %s130, 31
      %s132 = scalar_select %p131, %s130, 31
      %s133 = smul.addr %s132, 4
      %s134 = scalar_lea.vmem %s2, %s133
      %s135 = smul.u32 16, %s13
      %p136 = scmp.lt.s32.totalorder %s135, 31
      %s137 = scalar_select %p136, %s135, 31
      %s138 = smul.addr %s137, 8
      %s139 = scalar_lea.vmem %s0, %s138
      %s140 = smul.u32 16, %s13
      %s141 = smul.u32 16, %s13
      %p142 = scmp.lt.s32.totalorder %s141, 31
      %s143 = scalar_select %p142, %s141, 31
      %s144 = smul.addr %s143, 4
      %s145 = scalar_lea.vmem %s2, %s144
      %s146 = smul.u32 16, %s13
      %v148 = vld [vmem:[%s139] sm:$0xff]
      %v149 = vld [vmem:[%s139 + $0x8] sm:$0xff]
      %v150 = vld [vmem:[%s139 + $0x10] sm:$0xff]
      %v151 = vld [vmem:[%s139 + $0x18] sm:$0xff]
      %v152 = vld [vmem:[%s139 + $0x20] sm:$0xff]
      %v153 = vld [vmem:[%s139 + $0x28] sm:$0xff]
      %v154 = vld [vmem:[%s139 + $0x30] sm:$0xff]
      %v155 = vld [vmem:[%s139 + $0x38] sm:$0xff]
      %v156 = vld [vmem:[%s139 + $0x40] sm:$0xff]
      %v157 = vld [vmem:[%s139 + $0x48] sm:$0xff]
      %v158 = vld [vmem:[%s139 + $0x50] sm:$0xff]
      %v159 = vld [vmem:[%s139 + $0x58] sm:$0xff]
      %v160 = vld [vmem:[%s139 + $0x60] sm:$0xff]
      %v161 = vld [vmem:[%s139 + $0x68] sm:$0xff]
      %v162 = vld [vmem:[%s139 + $0x70] sm:$0xff]
      %v163 = vld [vmem:[%s139 + $0x78] sm:$0xff]
      %v164 = vpack.c.bf16 %v149, %v148
      %v165 = vpack.c.bf16 %v151, %v150
      %v166 = vpack.c.bf16 %v153, %v152
      %v167 = vpack.c.bf16 %v155, %v154
      %v168 = vpack.c.bf16 %v157, %v156
      %v169 = vpack.c.bf16 %v159, %v158
      %v170 = vpack.c.bf16 %v161, %v160
      %v171 = vpack.c.bf16 %v163, %v162
      %v172 = vld [vmem:[%s1] sm:$0xf]
      %v173 = vld [vmem:[%s1 + $0x4] sm:$0xf]
      %v174 = vld [vmem:[%s1 + $0x8] sm:$0xf]
      %v175 = vld [vmem:[%s1 + $0xc] sm:$0xf]
      %v176 = vld [vmem:[%s1 + $0x10] sm:$0xf]
      %v177 = vld [vmem:[%s1 + $0x14] sm:$0xf]
      %v178 = vld [vmem:[%s1 + $0x18] sm:$0xf]
      %v179 = vld [vmem:[%s1 + $0x1c] sm:$0xf]
      %v188 = vunpack.c.l.b16 %v172
      %v189 = vunpack.c.l.b16 %v173
      %v190 = vunpack.c.l.b16 %v174
      %v191 = vunpack.c.l.b16 %v175
      %v192 = vunpack.c.l.b16 %v176
      %v193 = vunpack.c.l.b16 %v177
      %v194 = vunpack.c.l.b16 %v178
      %v195 = vunpack.c.l.b16 %v179
      %v196 = vpack.c.b16 %v189, %v188
      %v197 = vpack.c.b16 %v191, %v190
      %v198 = vpack.c.b16 %v193, %v192
      %v199 = vpack.c.b16 %v195, %v194
      %vm204 = vcmask 523264
      %v206 = vsel %vm204, %v164, 0
      %v209 = vsel %vm204, %v165, 0
      %v212 = vsel %vm204, %v166, 0
      %v215 = vsel %vm204, %v167, 0
      %v218 = vsel %vm204, %v168, 0
      %v221 = vsel %vm204, %v169, 0
      %v224 = vsel %vm204, %v170, 0
      %v227 = vsel %vm204, %v171, 0
      %229 = vmatpush.bf16.msra.mxu0 0
      %230 = vmatpush.bf16.msra.mxu0 0
      %231 = vmatpush.bf16.msra.mxu0 0
      %232 = vmatpush.bf16.msra.mxu0 0
      %233 = vmatpush.bf16.msra.mxu0 %v199
      %234 = vmatpush.bf16.msra.mxu0 %v198
      %235 = vmatpush.bf16.msra.mxu0 %v197
      %236 = vmatpush.bf16.msra.mxu0 %v196
      %237 = vmatmul.bf16.gmra.mxu0 %v206
      %v238 = vpop.f32.mrf.mxu0
      %v239 = vadd.f32 0.0, %v238
      %v240 = vpop.f32.mrf.mxu0
      %v241 = vadd.f32 0.0, %v240
      %242 = vmatmul.bf16.gmra.mxu0 %v209
      %v243 = vpop.f32.mrf.mxu0
      %v244 = vadd.f32 0.0, %v243
      %v245 = vpop.f32.mrf.mxu0
      %v246 = vadd.f32 0.0, %v245
      %247 = vmatmul.bf16.gmra.mxu0 %v212
      %v248 = vpop.f32.mrf.mxu0
      %v249 = vadd.f32 0.0, %v248
      %v250 = vpop.f32.mrf.mxu0
      %v251 = vadd.f32 0.0, %v250
      %252 = vmatmul.bf16.gmra.mxu0 %v215
      %v253 = vpop.f32.mrf.mxu0
      %v254 = vadd.f32 0.0, %v253
      %v255 = vpop.f32.mrf.mxu0
      %v256 = vadd.f32 0.0, %v255
      %257 = vmatmul.bf16.gmra.mxu0 %v218
      %v258 = vpop.f32.mrf.mxu0
      %v259 = vadd.f32 0.0, %v258
      %v260 = vpop.f32.mrf.mxu0
      %v261 = vadd.f32 0.0, %v260
      %262 = vmatmul.bf16.gmra.mxu0 %v221
      %v263 = vpop.f32.mrf.mxu0
      %v264 = vadd.f32 0.0, %v263
      %v265 = vpop.f32.mrf.mxu0
      %v266 = vadd.f32 0.0, %v265
      %267 = vmatmul.bf16.gmra.mxu0 %v224
      %v268 = vpop.f32.mrf.mxu0
      %v269 = vadd.f32 0.0, %v268
      %v270 = vpop.f32.mrf.mxu0
      %v271 = vadd.f32 0.0, %v270
      %272 = vmatmul.bf16.gmra.mxu0 %v227
      %v273 = vpop.f32.mrf.mxu0
      %v274 = vadd.f32 0.0, %v273
      %v275 = vpop.f32.mrf.mxu0
      %v276 = vadd.f32 0.0, %v275
      %277 = vdwg.mxu0
      %v278 = vpack.c.bf16 %v239, %v239
      %v279 = vpack.c.bf16 %v241, %v241
      %v280 = vpack.c.bf16 %v244, %v244
      %v281 = vpack.c.bf16 %v246, %v246
      %v282 = vpack.c.bf16 %v249, %v249
      %v283 = vpack.c.bf16 %v251, %v251
      %v284 = vpack.c.bf16 %v254, %v254
      %v285 = vpack.c.bf16 %v256, %v256
      %v286 = vpack.c.bf16 %v259, %v259
      %v287 = vpack.c.bf16 %v261, %v261
      %v288 = vpack.c.bf16 %v264, %v264
      %v289 = vpack.c.bf16 %v266, %v266
      %v290 = vpack.c.bf16 %v269, %v269
      %v291 = vpack.c.bf16 %v271, %v271
      %v292 = vpack.c.bf16 %v274, %v274
      %v293 = vpack.c.bf16 %v276, %v276
      %294 = vst [vmem:[%s145] sm:$0xf] %v278
      %295 = vst [vmem:[%s145 + $0x4] sm:$0xf] %v279
      %296 = vst [vmem:[%s145 + $0x8] sm:$0xf] %v280
      %297 = vst [vmem:[%s145 + $0xc] sm:$0xf] %v281
      %298 = vst [vmem:[%s145 + $0x10] sm:$0xf] %v282
      %299 = vst [vmem:[%s145 + $0x14] sm:$0xf] %v283
      %300 = vst [vmem:[%s145 + $0x18] sm:$0xf] %v284
      %301 = vst [vmem:[%s145 + $0x1c] sm:$0xf] %v285
      %302 = vst [vmem:[%s145 + $0x20] sm:$0xf] %v286
      %303 = vst [vmem:[%s145 + $0x24] sm:$0xf] %v287
      %304 = vst [vmem:[%s145 + $0x28] sm:$0xf] %v288
      %305 = vst [vmem:[%s145 + $0x2c] sm:$0xf] %v289
      %306 = vst [vmem:[%s145 + $0x30] sm:$0xf] %v290
      %307 = vst [vmem:[%s145 + $0x34] sm:$0xf] %v291
      %308 = vst [vmem:[%s145 + $0x38] sm:$0xf] %v292
      %309 = vst [vmem:[%s145 + $0x3c] sm:$0xf] %v293
      %s310 = smul.u32 16, %s13
      %p311 = scmp.lt.s32.totalorder %s310, 31
      %s312 = scalar_select %p311, %s310, 31
      %s313 = smul.addr %s312, 4
      %s314 = scalar_lea.vmem %s2, %s313
      // Predicated region
      $region29: #{ifgcn_forward.2} parent=27 // pred_check
        %p315 = pneg %p78
      $region30: #{ifgcn_forward.2} parent=27 // pred_check_branch
        %317 = sbr.rel (%p315) target = $region32
      $region31: #{ifgcn_forward.2} parent=27 // pred_region
        %s318 = smul.u32 16, %s13
      $region32: #{ifgcn_forward.2} parent=27 // pred_fallthru
        _
    $region28: #{ifgcn_forward.2} parent=5 // pred_fallthru
      _
    %p319 = scmp.le.s32.totalorder 2, %s8
    // Predicated region
    $region33: #{ifgcn_forward.2} parent=5 // pred_check
      %p320 = pneg %p319
    $region34: #{ifgcn_forward.2} parent=5 // pred_check_branch
      %322 = sbr.rel (%p320) target = $region36
    $region35: #{ifgcn_forward.2} parent=5 // pred_region
      %s323 = ssub.s32 %s8, 2
      // Predicated region
      $region37: #{ifgcn_forward.2} parent=35 // pred_check
        %p324 = pneg %p84
      $region38: #{ifgcn_forward.2} parent=35 // pred_check_branch
        %326 = sbr.rel (%p324) target = $region40
      $region39: #{ifgcn_forward.2} parent=35 // pred_region
        %s327 = smul.u32 16, %s14
        %p328 = scmp.lt.s32.totalorder %s327, 31
        %s329 = scalar_select %p328, %s327, 31
        %s330 = smul.addr %s329, 4
        %s331 = scalar_lea.vmem %s2, %s330
      $region40: #{ifgcn_forward.2} parent=35 // pred_fallthru
        _
    $region36: #{ifgcn_forward.2} parent=5 // pred_fallthru
      _
  $region6: #{ifgcn_forward.2} parent=0 // loop_footer
    %s12 = sadd.s32 1, %s8
  $region7: #{ifgcn_forward.2} parent=0 // loop_footer_branch
    %7 = sbr.rel target = $region3
  $region8: #{ifgcn_forward.2} parent=0 // loop_exit
    _

// kernel: ifgcn_forward.3
$region0: #{ifgcn_forward.3}
  #allocation0 [shape = 'u32[]', space=smem, size = 0x4, offset = 0x4, fixed_abs, tag = 'smem constant byte address 0x4 - core index']
  #allocation1 [shape = 'u32[72,128]{1,0:T(1,128)}', space=vmem, size = 0x9000, scoped, tag = 'internal scratch']
  #allocation2 [shape = 'f32[128,128]{1,0:T(8,128)}', space=vmem, size = 0x10000, scoped, tag = 'scratch operand']
  %s0 = inlined_call_operand.vmem [shape: f32[256,256], index: 0, kind: input, shape index: {}]
  %s1 = inlined_call_operand.vmem [shape: bf16[256,128], index: 1, kind: input, shape index: {}]
  %s2 = inlined_call_operand.vmem [shape: f32[1,128], index: 2, kind: input, shape index: {}]
  %s3 = inlined_call_operand.vmem [shape: f32[256,128], index: 3, kind: output, shape index: {}]
  %s4 = sld [smem:[#allocation0]]
  $region91: #{ifgcn_forward.3} parent=0
    _
  %s6 = ssub.s32 1, %s4
  %s7 = scalar_select 0, %s6, %s4
  $region1: #{ifgcn_forward.3} parent=0
    #allocation3 [shape = 'u8[131072]{0}', space=vmem, size = 0x20000, scoped, tag = 'input window, operand 0']
    loop: start=0, step=1, limit=6
    $region2: #{ifgcn_forward.3} parent=1 // loop_pre_header
      _
    $region3: #{ifgcn_forward.3} parent=1 // loop_header
      %s9 = sphi 0, %s13
      %p10 = scmp.ge.s32.totalorder %s9, 6
      %s16 = sphi 0, %s28
      %s17 = sphi 0, %s24
      %s18 = sphi 0, %s16
      %s19 = sphi 0, %s17
      %s20 = sphi 0, %s18
      %s21 = sphi 0, %s19
      %s33 = sphi 0, %s35
      %s36 = sphi 0, %s33
      %s37 = sphi 0, %s36
      %s53 = sphi 0, %s37
      %s59 = sphi 0, %s61
      %s62 = sphi 0, %s59
      %s63 = sphi 0, %s62
      %s79 = sphi 0, %s63
      %s83 = sphi 0, %s83
      %s85 = sphi 0, %s83
      %s86 = sphi 0, %s85
      %s100 = sphi 0, %s86
      %s106 = sphi 0, %s108
      %s109 = sphi 0, %s106
      %s110 = sphi 0, %s109
      %s126 = sphi 0, %s110
    $region4: #{ifgcn_forward.3} parent=1 // loop_header_branch
      %12 = sbr.rel (%p10) target = $region8
    $region5: #{ifgcn_forward.3} parent=1 // loop_body
      %s14 = ssub.s32 %s9, 1
      %s15 = ssub.s32 %s9, 2
      %s22 = sadd.s32 1, %s17
      %p23 = scmp.ge.s32.totalorder %s22, 2
      %s24 = scalar_select %p23, 0, %s22
      %s25 = sadd.s32 1, %s16
      %s26 = scalar_select %p23, %s25, %s16
      %p27 = scmp.ge.s32.totalorder %s26, 2
      %s28 = scalar_select %p27, 0, %s26
      %s29 = ssub.s32 %s16, %s28
      %s30 = ssub.s32 %s17, %s24
      %s31 = sor.u32 %s29, %s30
      %p32 = scmp.eq.s32.totalorder %s31, 0
      %s34 = sadd.s32 %s33, 1
      %s35 = scalar_select %p32, %s33, %s34
      %p38 = pneg %p32
      %p39 = scmp.eq.s32.totalorder %s9, 3
      %p40 = por %p38, %p39
      %p41 = scmp.ne.s32.totalorder %s33, %s36
      %p42 = scmp.eq.s32.totalorder %s9, 0
      %p43 = por %p41, %p42
      %p44 = scmp.ne.s32.totalorder %s33, %s36
      %p45 = scmp.eq.s32.totalorder %s14, 3
      %p46 = por %p44, %p45
      %p47 = scmp.ne.s32.totalorder %s36, %s37
      %p48 = scmp.eq.s32.totalorder %s14, 0
      %p49 = por %p47, %p48
      %p50 = scmp.ne.s32.totalorder %s36, %s37
      %p51 = scmp.eq.s32.totalorder %s15, 3
      %p52 = por %p50, %p51
      %p54 = scmp.ne.s32.totalorder %s37, %s53
      %p55 = scmp.eq.s32.totalorder %s15, 0
      %p56 = por %p54, %p55
      %s57 = ssub.s32 %s17, %s24
      %p58 = scmp.eq.s32.totalorder %s57, 0
      %s60 = sadd.s32 %s59, 1
      %s61 = scalar_select %p58, %s59, %s60
      %p64 = pneg %p58
      %p65 = scmp.eq.s32.totalorder %s9, 3
      %p66 = por %p64, %p65
      %p67 = scmp.ne.s32.totalorder %s59, %s62
      %p68 = scmp.eq.s32.totalorder %s9, 0
      %p69 = por %p67, %p68
      %p70 = scmp.ne.s32.totalorder %s59, %s62
      %p71 = scmp.eq.s32.totalorder %s14, 3
      %p72 = por %p70, %p71
      %p73 = scmp.ne.s32.totalorder %s62, %s63
      %p74 = scmp.eq.s32.totalorder %s14, 0
      %p75 = por %p73, %p74
      %p76 = scmp.ne.s32.totalorder %s62, %s63
      %p77 = scmp.eq.s32.totalorder %s15, 3
      %p78 = por %p76, %p77
      %p80 = scmp.ne.s32.totalorder %s63, %s79
      %p81 = scmp.eq.s32.totalorder %s15, 0
      %p82 = por %p80, %p81
      %s84 = sadd.s32 %s83, 1
      %p87 = scmp.eq.s32.totalorder %s9, 3
      %p88 = scmp.ne.s32.totalorder %s83, %s85
      %p89 = scmp.eq.s32.totalorder %s9, 0
      %p90 = por %p88, %p89
      %p91 = scmp.ne.s32.totalorder %s83, %s85
      %p92 = scmp.eq.s32.totalorder %s14, 3
      %p93 = por %p91, %p92
      %p94 = scmp.ne.s32.totalorder %s85, %s86
      %p95 = scmp.eq.s32.totalorder %s14, 0
      %p96 = por %p94, %p95
      %p97 = scmp.ne.s32.totalorder %s85, %s86
      %p98 = scmp.eq.s32.totalorder %s15, 3
      %p99 = por %p97, %p98
      %p101 = scmp.ne.s32.totalorder %s86, %s100
      %p102 = scmp.eq.s32.totalorder %s15, 0
      %p103 = por %p101, %p102
      %s104 = ssub.s32 %s16, %s28
      %p105 = scmp.eq.s32.totalorder %s104, 0
      %s107 = sadd.s32 %s106, 1
      %s108 = scalar_select %p105, %s106, %s107
      %p111 = pneg %p105
      %p112 = scmp.eq.s32.totalorder %s9, 3
      %p113 = por %p111, %p112
      %p114 = scmp.ne.s32.totalorder %s106, %s109
      %p115 = scmp.eq.s32.totalorder %s9, 0
      %p116 = por %p114, %p115
      %p117 = scmp.ne.s32.totalorder %s106, %s109
      %p118 = scmp.eq.s32.totalorder %s14, 3
      %p119 = por %p117, %p118
      %p120 = scmp.ne.s32.totalorder %s109, %s110
      %p121 = scmp.eq.s32.totalorder %s14, 0
      %p122 = por %p120, %p121
      %p123 = scmp.ne.s32.totalorder %s109, %s110
      %p124 = scmp.eq.s32.totalorder %s15, 3
      %p125 = por %p123, %p124
      %p127 = scmp.ne.s32.totalorder %s110, %s126
      %p128 = scmp.eq.s32.totalorder %s15, 0
      %p129 = por %p127, %p128
      %p130 = scmp.le.s32.totalorder 1, %s9
      %p131 = scmp.lt.s32.totalorder %s9, 5
      %p132 = pnand %p130, %p131
      %p133 = pneg %p132
      // Predicated region
      $region9: #{ifgcn_forward.3} parent=5 // pred_check
        _
      $region10: #{ifgcn_forward.3} parent=5 // pred_check_branch
        %135 = sbr.rel (%p132) target = $region12
      $region11: #{ifgcn_forward.3} parent=5 // pred_region
        %s136 = ssub.s32 %s9, 1
        // Predicated region
        $region13: #{ifgcn_forward.3} parent=11 // pred_check
          %p137 = pneg %p96
        $region14: #{ifgcn_forward.3} parent=11 // pred_check_branch
          %139 = sbr.rel (%p137) target = $region16
        $region15: #{ifgcn_forward.3} parent=11 // pred_region
          _
        $region16: #{ifgcn_forward.3} parent=11 // pred_fallthru
          _
      $region12: #{ifgcn_forward.3} parent=5 // pred_fallthru
        _
      %p140 = scmp.lt.s32.totalorder %s9, 4
      // Predicated region
      $region17: #{ifgcn_forward.3} parent=5 // pred_check
        %p141 = pneg %p140
      $region18: #{ifgcn_forward.3} parent=5 // pred_check_branch
        %143 = sbr.rel (%p141) target = $region20
      $region19: #{ifgcn_forward.3} parent=5 // pred_region
        // Predicated region
        $region21: #{ifgcn_forward.3} parent=19 // pred_check
          %p144 = pneg %p43
        $region22: #{ifgcn_forward.3} parent=19 // pred_check_branch
          %146 = sbr.rel (%p144) target = $region24
        $region23: #{ifgcn_forward.3} parent=19 // pred_region
          %s147 = sand.u32 %s33, 1
          %s148 = sand.u32 %s33, 1
          %s149 = smul.addr %s148, 128
          %s150 = scalar_lea.vmem [#allocation3], %s149
          %s151 = smul.u32 16, %s16
          %s152 = smul.addr %s151, 2
          %s153 = sadd.s32 %s17, %s152
          %s154 = smul.addr %s153, 8
          %s155 = scalar_lea.vmem %s0, %s154
          // Predicated region
          $region25: #{ifgcn_forward.3} parent=23 // pred_check
            _
          $region26: #{ifgcn_forward.3} parent=23 // pred_check_branch
            %157 = sbr.rel (0) target = $region28
          $region27: #{ifgcn_forward.3} parent=23 // pred_region
            // Predicated region
            $region29: #{ifgcn_forward.3} parent=27 // pred_check
              _
            $region30: #{ifgcn_forward.3} parent=27 // pred_check_branch
              %159 = sbr.rel (0) target = $region32
            $region31: #{ifgcn_forward.3} parent=27 // pred_region
              // Predicated region
              $region44: #{ifgcn_forward.3} parent=31 // pred_check
                _
              $region45: #{ifgcn_forward.3} parent=31 // pred_check_branch
                %205 = sbr.rel (0) target = $region47
              $region46: #{ifgcn_forward.3} parent=31 // pred_region
                loop: start=0, step=1, limit=1
                $region48: #{ifgcn_forward.3} parent=46 // loop_pre_header
                  _
                $region49: #{ifgcn_forward.3} parent=46 // loop_header
                  %s207 = sphi 0, %s211
                  %p208 = scmp.ge.s32.totalorder %s207, 1
                  %s212 = sphi %s155, %s155
                  %s213 = sphi %s150, %s150
                $region50: #{ifgcn_forward.3} parent=46 // loop_header_branch
                  %210 = sbr.rel (%p208) target = $region54
                $region51: #{ifgcn_forward.3} parent=46 // loop_body
                  %v214 = vld [vmem:[%s212] sm:$0xff]
                  %215 = vst [vmem:[%s213] sm:$0xff] %v214
                  %v216 = vld [vmem:[%s212 + $0x10] sm:$0xff]
                  %217 = vst [vmem:[%s213 + $0x8] sm:$0xff] %v216
                  %v218 = vld [vmem:[%s212 + $0x20] sm:$0xff]
                  %219 = vst [vmem:[%s213 + $0x10] sm:$0xff] %v218
                  %v220 = vld [vmem:[%s212 + $0x30] sm:$0xff]
                  %221 = vst [vmem:[%s213 + $0x18] sm:$0xff] %v220
                  %v222 = vld [vmem:[%s212 + $0x40] sm:$0xff]
                  %223 = vst [vmem:[%s213 + $0x20] sm:$0xff] %v222
                  %v224 = vld [vmem:[%s212 + $0x50] sm:$0xff]
                  %225 = vst [vmem:[%s213 + $0x28] sm:$0xff] %v224
                  %v226 = vld [vmem:[%s212 + $0x60] sm:$0xff]
                  %227 = vst [vmem:[%s213 + $0x30] sm:$0xff] %v226
                  %v228 = vld [vmem:[%s212 + $0x70] sm:$0xff]
                  %229 = vst [vmem:[%s213 + $0x38] sm:$0xff] %v228
                  %v230 = vld [vmem:[%s212 + $0x80] sm:$0xff]
                  %231 = vst [vmem:[%s213 + $0x40] sm:$0xff] %v230
                  %v232 = vld [vmem:[%s212 + $0x90] sm:$0xff]
                  %233 = vst [vmem:[%s213 + $0x48] sm:$0xff] %v232
                  %v234 = vld [vmem:[%s212 + $0xa0] sm:$0xff]
                  %235 = vst [vmem:[%s213 + $0x50] sm:$0xff] %v234
                  %v236 = vld [vmem:[%s212 + $0xb0] sm:$0xff]
                  %237 = vst [vmem:[%s213 + $0x58] sm:$0xff] %v236
                  %v238 = vld [vmem:[%s212 + $0xc0] sm:$0xff]
                  %239 = vst [vmem:[%s213 + $0x60] sm:$0xff] %v238
                  %v240 = vld [vmem:[%s212 + $0xd0] sm:$0xff]
                  %241 = vst [vmem:[%s213 + $0x68] sm:$0xff] %v240
                  %v242 = vld [vmem:[%s212 + $0xe0] sm:$0xff]
                  %243 = vst [vmem:[%s213 + $0x70] sm:$0xff] %v242
                  %v244 = vld [vmem:[%s212 + $0xf0] sm:$0xff]
                  %245 = vst [vmem:[%s213 + $0x78] sm:$0xff] %v244
                $region52: #{ifgcn_forward.3} parent=46 // loop_footer
                  %s211 = sadd.s32 1, %s207
                $region53: #{ifgcn_forward.3} parent=46 // loop_footer_branch
                  %206 = sbr.rel target = $region49
                $region54: #{ifgcn_forward.3} parent=46 // loop_exit
                  _
              $region47: #{ifgcn_forward.3} parent=31 // pred_fallthru
                _
              // Predicated region
              $region55: #{ifgcn_forward.3} parent=31 // pred_check
                _
              $region56: #{ifgcn_forward.3} parent=31 // pred_check_branch
                %247 = sbr.rel target = $region58
              $region57: #{ifgcn_forward.3} parent=31 // pred_region
                _
              $region58: #{ifgcn_forward.3} parent=31 // pred_fallthru
                _
            $region32: #{ifgcn_forward.3} parent=27 // pred_fallthru
              _
            // Predicated region
            $region33: #{ifgcn_forward.3} parent=27 // pred_check
              _
            $region34: #{ifgcn_forward.3} parent=27 // pred_check_branch
              %161 = sbr.rel target = $region36
            $region35: #{ifgcn_forward.3} parent=27 // pred_region
              %s163 = ssub.s32 256, 1
              loop: start=0, step=1, limit=1
              $region37: #{ifgcn_forward.3} parent=35 // loop_pre_header
                _
              $region38: #{ifgcn_forward.3} parent=35 // loop_header
                %s165 = sphi 0, %s169
                %p166 = scmp.ge.s32.totalorder %s165, 1
                %s170 = sphi %s155, %s155
                %s171 = sphi %s150, %s150
              $region39: #{ifgcn_forward.3} parent=35 // loop_header_branch
                %168 = sbr.rel (%p166) target = $region43
              $region40: #{ifgcn_forward.3} parent=35 // loop_body
                %v172 = vld [vmem:[%s170] sm:%s163]
                %173 = vst [vmem:[%s171] sm:%s163] %v172
                %v174 = vld [vmem:[%s170 + $0x10] sm:%s163]
                %175 = vst [vmem:[%s171 + $0x8] sm:%s163] %v174
                %v176 = vld [vmem:[%s170 + $0x20] sm:%s163]
                %177 = vst [vmem:[%s171 + $0x10] sm:%s163] %v176
                %v178 = vld [vmem:[%s170 + $0x30] sm:%s163]
                %179 = vst [vmem:[%s171 + $0x18] sm:%s163] %v178
                %v180 = vld [vmem:[%s170 + $0x40] sm:%s163]
                %181 = vst [vmem:[%s171 + $0x20] sm:%s163] %v180
                %v182 = vld [vmem:[%s170 + $0x50] sm:%s163]
                %183 = vst [vmem:[%s171 + $0x28] sm:%s163] %v182
                %v184 = vld [vmem:[%s170 + $0x60] sm:%s163]
                %185 = vst [vmem:[%s171 + $0x30] sm:%s163] %v184
                %v186 = vld [vmem:[%s170 + $0x70] sm:%s163]
                %187 = vst [vmem:[%s171 + $0x38] sm:%s163] %v186
                %v188 = vld [vmem:[%s170 + $0x80] sm:%s163]
                %189 = vst [vmem:[%s171 + $0x40] sm:%s163] %v188
                %v190 = vld [vmem:[%s170 + $0x90] sm:%s163]
                %191 = vst [vmem:[%s171 + $0x48] sm:%s163] %v190
                %v192 = vld [vmem:[%s170 + $0xa0] sm:%s163]
                %193 = vst [vmem:[%s171 + $0x50] sm:%s163] %v192
                %v194 = vld [vmem:[%s170 + $0xb0] sm:%s163]
                %195 = vst [vmem:[%s171 + $0x58] sm:%s163] %v194
                %v196 = vld [vmem:[%s170 + $0xc0] sm:%s163]
                %197 = vst [vmem:[%s171 + $0x60] sm:%s163] %v196
                %v198 = vld [vmem:[%s170 + $0xd0] sm:%s163]
                %199 = vst [vmem:[%s171 + $0x68] sm:%s163] %v198
                %v200 = vld [vmem:[%s170 + $0xe0] sm:%s163]
                %201 = vst [vmem:[%s171 + $0x70] sm:%s163] %v200
                %v202 = vld [vmem:[%s170 + $0xf0] sm:%s163]
                %203 = vst [vmem:[%s171 + $0x78] sm:%s163] %v202
              $region41: #{ifgcn_forward.3} parent=35 // loop_footer
                %s169 = sadd.s32 1, %s165
              $region42: #{ifgcn_forward.3} parent=35 // loop_footer_branch
                %164 = sbr.rel target = $region38
              $region43: #{ifgcn_forward.3} parent=35 // loop_exit
                _
            $region36: #{ifgcn_forward.3} parent=27 // pred_fallthru
              _
          $region28: #{ifgcn_forward.3} parent=23 // pred_fallthru
            _
          %248 = vnop
        $region24: #{ifgcn_forward.3} parent=19 // pred_fallthru
          _
        // Predicated region
        $region59: #{ifgcn_forward.3} parent=19 // pred_check
          %p249 = pneg %p69
        $region60: #{ifgcn_forward.3} parent=19 // pred_check_branch
          %251 = sbr.rel (%p249) target = $region62
        $region61: #{ifgcn_forward.3} parent=19 // pred_region
          %s252 = smul.u32 16, %s17
          %p253 = scmp.lt.s32.totalorder %s252, 31
          %s254 = scalar_select %p253, %s252, 31
          %s255 = smul.addr %s254, 4
          %s256 = scalar_lea.vmem %s1, %s255
          %s257 = smul.u32 16, %s17
        $region62: #{ifgcn_forward.3} parent=19 // pred_fallthru
          _
      $region20: #{ifgcn_forward.3} parent=5 // pred_fallthru
        _
      %p258 = scmp.le.s32.totalorder 1, %s9
      %p259 = scmp.lt.s32.totalorder %s9, 5
      %p260 = pnand %p258, %p259
      %p261 = pneg %p260
      // Predicated region
      $region63: #{ifgcn_forward.3} parent=5 // pred_check
        _
      $region64: #{ifgcn_forward.3} parent=5 // pred_check_branch
        %263 = sbr.rel (%p260) target = $region66
      $region65: #{ifgcn_forward.3} parent=5 // pred_region
        %s264 = ssub.s32 %s9, 1
        %s265 = sand.u32 %s36, 1
        %s266 = sand.u32 %s36, 1
        %s267 = smul.addr %s266, 128
        %s268 = scalar_lea.vmem [#allocation3], %s267
        // Predicated region
        $region67: #{ifgcn_forward.3} parent=65 // pred_check
          %p269 = pneg %p49
        $region68: #{ifgcn_forward.3} parent=65 // pred_check_branch
          %271 = sbr.rel (%p269) target = $region70
        $region69: #{ifgcn_forward.3} parent=65 // pred_region
          _
        $region70: #{ifgcn_forward.3} parent=65 // pred_fallthru
          _
        %s272 = sand.u32 %s36, 1
        %s273 = sand.u32 %s36, 1
        %s274 = smul.addr %s273, 128
        %s275 = scalar_lea.vmem [#allocation3], %s274
        %p276 = pneg %p49
        %p277 = pneg %p46
        %s278 = smul.u32 16, %s19
        %p279 = scmp.lt.s32.totalorder %s278, 31
        %s280 = scalar_select %p279, %s278, 31
        %s281 = smul.addr %s280, 4
        %s282 = scalar_lea.vmem %s1, %s281
        %p283 = pneg %p75
        %p284 = pneg %p72
        %p285 = pneg %p96
        %p286 = pneg %p93
        %p287 = pneg %p122
        %p288 = pneg %p119
        %s289 = smul.u32 16, %s18
        %p290 = scmp.lt.s32.totalorder %s289, 31
        %s291 = scalar_select %p290, %s289, 31
        %s292 = smul.addr %s291, 8
        %s293 = scalar_lea.vmem %s3, %s292
        %s294 = smul.u32 16, %s18
        %s295 = smul.u32 16, %s19
        %p296 = scmp.lt.s32.totalorder %s295, 31
        %s297 = scalar_select %p296, %s295, 31
        %s298 = smul.addr %s297, 4
        %s299 = scalar_lea.vmem %s1, %s298
        %s300 = smul.u32 16, %s19
        %s301 = smul.u32 16, %s18
        %p302 = scmp.lt.s32.totalorder %s301, 31
        %s303 = scalar_select %p302, %s301, 31
        %s304 = smul.addr %s303, 8
        %s305 = scalar_lea.vmem %s3, %s304
        %s306 = smul.u32 16, %s18
        %p307 = scmp.eq.s32.totalorder %s19, 0
        // Predicated region
        $region71: #{ifgcn_forward.3} parent=65 // pred_check
          %p308 = pneg %p307
        $region72: #{ifgcn_forward.3} parent=65 // pred_check_branch
          %310 = sbr.rel (%p308) target = $region74
        $region73: #{ifgcn_forward.3} parent=65 // pred_region
          %311 = vst [vmem:[#allocation2] sm:$0xff] 0.0
          %312 = vst [vmem:[#allocation2 + $0x8] sm:$0xff] 0.0
          %313 = vst [vmem:[#allocation2 + $0x10] sm:$0xff] 0.0
          %314 = vst [vmem:[#allocation2 + $0x18] sm:$0xff] 0.0
          %315 = vst [vmem:[#allocation2 + $0x20] sm:$0xff] 0.0
          %316 = vst [vmem:[#allocation2 + $0x28] sm:$0xff] 0.0
          %317 = vst [vmem:[#allocation2 + $0x30] sm:$0xff] 0.0
          %318 = vst [vmem:[#allocation2 + $0x38] sm:$0xff] 0.0
          %319 = vst [vmem:[#allocation2 + $0x40] sm:$0xff] 0.0
          %320 = vst [vmem:[#allocation2 + $0x48] sm:$0xff] 0.0
          %321 = vst [vmem:[#allocation2 + $0x50] sm:$0xff] 0.0
          %322 = vst [vmem:[#allocation2 + $0x58] sm:$0xff] 0.0
          %323 = vst [vmem:[#allocation2 + $0x60] sm:$0xff] 0.0
          %324 = vst [vmem:[#allocation2 + $0x68] sm:$0xff] 0.0
          %325 = vst [vmem:[#allocation2 + $0x70] sm:$0xff] 0.0
          %326 = vst [vmem:[#allocation2 + $0x78] sm:$0xff] 0.0
        $region74: #{ifgcn_forward.3} parent=65 // pred_fallthru
          _
        %v327 = vld [vmem:[%s268] sm:$0xff]
        %v328 = vld [vmem:[%s268 + $0x8] sm:$0xff]
        %v329 = vld [vmem:[%s268 + $0x10] sm:$0xff]
        %v330 = vld [vmem:[%s268 + $0x18] sm:$0xff]
        %v331 = vld [vmem:[%s268 + $0x20] sm:$0xff]
        %v332 = vld [vmem:[%s268 + $0x28] sm:$0xff]
        %v333 = vld [vmem:[%s268 + $0x30] sm:$0xff]
        %v334 = vld [vmem:[%s268 + $0x38] sm:$0xff]
        %v335 = vld [vmem:[%s268 + $0x40] sm:$0xff]
        %v336 = vld [vmem:[%s268 + $0x48] sm:$0xff]
        %v337 = vld [vmem:[%s268 + $0x50] sm:$0xff]
        %v338 = vld [vmem:[%s268 + $0x58] sm:$0xff]
        %v339 = vld [vmem:[%s268 + $0x60] sm:$0xff]
        %v340 = vld [vmem:[%s268 + $0x68] sm:$0xff]
        %v341 = vld [vmem:[%s268 + $0x70] sm:$0xff]
        %v342 = vld [vmem:[%s268 + $0x78] sm:$0xff]
        %v343 = vpack.c.bf16 %v328, %v327
        %v344 = vpack.c.bf16 %v330, %v329
        %v345 = vpack.c.bf16 %v332, %v331
        %v346 = vpack.c.bf16 %v334, %v333
        %v347 = vpack.c.bf16 %v336, %v335
        %v348 = vpack.c.bf16 %v338, %v337
        %v349 = vpack.c.bf16 %v340, %v339
        %v350 = vpack.c.bf16 %v342, %v341
        %v351 = vld [vmem:[#allocation2] sm:$0xff]
        %v352 = vld [vmem:[#allocation2 + $0x8] sm:$0xff]
        %v353 = vld [vmem:[#allocation2 + $0x10] sm:$0xff]
        %v354 = vld [vmem:[#allocation2 + $0x18] sm:$0xff]
        %v355 = vld [vmem:[#allocation2 + $0x20] sm:$0xff]
        %v356 = vld [vmem:[#allocation2 + $0x28] sm:$0xff]
        %v357 = vld [vmem:[#allocation2 + $0x30] sm:$0xff]
        %v358 = vld [vmem:[#allocation2 + $0x38] sm:$0xff]
        %v359 = vld [vmem:[#allocation2 + $0x40] sm:$0xff]
        %v360 = vld [vmem:[#allocation2 + $0x48] sm:$0xff]
        %v361 = vld [vmem:[#allocation2 + $0x50] sm:$0xff]
        %v362 = vld [vmem:[#allocation2 + $0x58] sm:$0xff]
        %v363 = vld [vmem:[#allocation2 + $0x60] sm:$0xff]
        %v364 = vld [vmem:[#allocation2 + $0x68] sm:$0xff]
        %v365 = vld [vmem:[#allocation2 + $0x70] sm:$0xff]
        %v366 = vld [vmem:[#allocation2 + $0x78] sm:$0xff]
        %v367 = vld [vmem:[%s299] sm:$0xf]
        %v368 = vld [vmem:[%s299 + $0x4] sm:$0xf]
        %v369 = vld [vmem:[%s299 + $0x8] sm:$0xf]
        %v370 = vld [vmem:[%s299 + $0xc] sm:$0xf]
        %v371 = vld [vmem:[%s299 + $0x10] sm:$0xf]
        %v372 = vld [vmem:[%s299 + $0x14] sm:$0xf]
        %v373 = vld [vmem:[%s299 + $0x18] sm:$0xf]
        %v374 = vld [vmem:[%s299 + $0x1c] sm:$0xf]
        %v375 = vld [vmem:[%s299 + $0x20] sm:$0xf]
        %v376 = vld [vmem:[%s299 + $0x24] sm:$0xf]
        %v377 = vld [vmem:[%s299 + $0x28] sm:$0xf]
        %v378 = vld [vmem:[%s299 + $0x2c] sm:$0xf]
        %v379 = vld [vmem:[%s299 + $0x30] sm:$0xf]
        %v380 = vld [vmem:[%s299 + $0x34] sm:$0xf]
        %v381 = vld [vmem:[%s299 + $0x38] sm:$0xf]
        %v382 = vld [vmem:[%s299 + $0x3c] sm:$0xf]
        %v399 = vunpack.c.l.b16 %v367
        %v400 = vunpack.c.l.b16 %v368
        %v401 = vunpack.c.l.b16 %v369
        %v402 = vunpack.c.l.b16 %v370
        %v403 = vunpack.c.l.b16 %v371
        %v404 = vunpack.c.l.b16 %v372
        %v405 = vunpack.c.l.b16 %v373
        %v406 = vunpack.c.l.b16 %v374
        %v407 = vunpack.c.l.b16 %v375
        %v408 = vunpack.c.l.b16 %v376
        %v409 = vunpack.c.l.b16 %v377
        %v410 = vunpack.c.l.b16 %v378
        %v411 = vunpack.c.l.b16 %v379
        %v412 = vunpack.c.l.b16 %v380
        %v413 = vunpack.c.l.b16 %v381
        %v414 = vunpack.c.l.b16 %v382
        %v415 = vpack.c.b16 %v400, %v399
        %v416 = vpack.c.b16 %v402, %v401
        %v417 = vpack.c.b16 %v404, %v403
        %v418 = vpack.c.b16 %v406, %v405
        %v419 = vpack.c.b16 %v408, %v407
        %v420 = vpack.c.b16 %v410, %v409
        %v421 = vpack.c.b16 %v412, %v411
        %v422 = vpack.c.b16 %v414, %v413
        %431 = vmatpush.bf16.msra.mxu0 %v422
        %432 = vmatpush.bf16.msra.mxu0 %v421
        %433 = vmatpush.bf16.msra.mxu0 %v420
        %434 = vmatpush.bf16.msra.mxu0 %v419
        %435 = vmatpush.bf16.msra.mxu0 %v418
        %436 = vmatpush.bf16.msra.mxu0 %v417
        %437 = vmatpush.bf16.msra.mxu0 %v416
        %438 = vmatpush.bf16.msra.mxu0 %v415
        %439 = vmatmul.bf16.gmra.mxu0 %v343
        %v440 = vpop.f32.mrf.mxu0
        %v441 = vadd.f32 0.0, %v440
        %v442 = vpop.f32.mrf.mxu0
        %v443 = vadd.f32 0.0, %v442
        %444 = vmatmul.bf16.gmra.mxu0 %v344
        %v445 = vpop.f32.mrf.mxu0
        %v446 = vadd.f32 0.0, %v445
        %v447 = vpop.f32.mrf.mxu0
        %v448 = vadd.f32 0.0, %v447
        %449 = vmatmul.bf16.gmra.mxu0 %v345
        %v450 = vpop.f32.mrf.mxu0
        %v451 = vadd.f32 0.0, %v450
        %v452 = vpop.f32.mrf.mxu0
        %v453 = vadd.f32 0.0, %v452
        %454 = vmatmul.bf16.gmra.mxu0 %v346
        %v455 = vpop.f32.mrf.mxu0
        %v456 = vadd.f32 0.0, %v455
        %v457 = vpop.f32.mrf.mxu0
        %v458 = vadd.f32 0.0, %v457
        %459 = vmatmul.bf16.gmra.mxu0 %v347
        %v460 = vpop.f32.mrf.mxu0
        %v461 = vadd.f32 0.0, %v460
        %v462 = vpop.f32.mrf.mxu0
        %v463 = vadd.f32 0.0, %v462
        %464 = vmatmul.bf16.gmra.mxu0 %v348
        %v465 = vpop.f32.mrf.mxu0
        %v466 = vadd.f32 0.0, %v465
        %v467 = vpop.f32.mrf.mxu0
        %v468 = vadd.f32 0.0, %v467
        %469 = vmatmul.bf16.gmra.mxu0 %v349
        %v470 = vpop.f32.mrf.mxu0
        %v471 = vadd.f32 0.0, %v470
        %v472 = vpop.f32.mrf.mxu0
        %v473 = vadd.f32 0.0, %v472
        %474 = vmatmul.bf16.gmra.mxu0 %v350
        %v475 = vpop.f32.mrf.mxu0
        %v476 = vadd.f32 0.0, %v475
        %v477 = vpop.f32.mrf.mxu0
        %v478 = vadd.f32 0.0, %v477
        %479 = vdwg.mxu0
        %v480 = vadd.f32 %v351, %v441
        %v481 = vadd.f32 %v352, %v443
        %v482 = vadd.f32 %v353, %v446
        %v483 = vadd.f32 %v354, %v448
        %v484 = vadd.f32 %v355, %v451
        %v485 = vadd.f32 %v356, %v453
        %v486 = vadd.f32 %v357, %v456
        %v487 = vadd.f32 %v358, %v458
        %v488 = vadd.f32 %v359, %v461
        %v489 = vadd.f32 %v360, %v463
        %v490 = vadd.f32 %v361, %v466
        %v491 = vadd.f32 %v362, %v468
        %v492 = vadd.f32 %v363, %v471
        %v493 = vadd.f32 %v364, %v473
        %v494 = vadd.f32 %v365, %v476
        %v495 = vadd.f32 %v366, %v478
        %496 = vst [vmem:[#allocation2] sm:$0xff] %v480
        %497 = vst [vmem:[#allocation2 + $0x8] sm:$0xff] %v481
        %498 = vst [vmem:[#allocation2 + $0x10] sm:$0xff] %v482
        %499 = vst [vmem:[#allocation2 + $0x18] sm:$0xff] %v483
        %500 = vst [vmem:[#allocation2 + $0x20] sm:$0xff] %v484
        %501 = vst [vmem:[#allocation2 + $0x28] sm:$0xff] %v485
        %502 = vst [vmem:[#allocation2 + $0x30] sm:$0xff] %v486
        %503 = vst [vmem:[#allocation2 + $0x38] sm:$0xff] %v487
        %504 = vst [vmem:[#allocation2 + $0x40] sm:$0xff] %v488
        %505 = vst [vmem:[#allocation2 + $0x48] sm:$0xff] %v489
        %506 = vst [vmem:[#allocation2 + $0x50] sm:$0xff] %v490
        %507 = vst [vmem:[#allocation2 + $0x58] sm:$0xff] %v491
        %508 = vst [vmem:[#allocation2 + $0x60] sm:$0xff] %v492
        %509 = vst [vmem:[#allocation2 + $0x68] sm:$0xff] %v493
        %510 = vst [vmem:[#allocation2 + $0x70] sm:$0xff] %v494
        %511 = vst [vmem:[#allocation2 + $0x78] sm:$0xff] %v495
        %p512 = scmp.eq.s32.totalorder %s19, 1
        // Predicated region
        $region75: #{ifgcn_forward.3} parent=65 // pred_check
          %p513 = pneg %p512
        $region76: #{ifgcn_forward.3} parent=65 // pred_check_branch
          %515 = sbr.rel (%p513) target = $region78
        $region77: #{ifgcn_forward.3} parent=65 // pred_region
          %v516 = vld [vmem:[#allocation2] sm:$0xff]
          %v517 = vld [vmem:[#allocation2 + $0x8] sm:$0xff]
          %v518 = vld [vmem:[#allocation2 + $0x10] sm:$0xff]
          %v519 = vld [vmem:[#allocation2 + $0x18] sm:$0xff]
          %v520 = vld [vmem:[#allocation2 + $0x20] sm:$0xff]
          %v521 = vld [vmem:[#allocation2 + $0x28] sm:$0xff]
          %v522 = vld [vmem:[#allocation2 + $0x30] sm:$0xff]
          %v523 = vld [vmem:[#allocation2 + $0x38] sm:$0xff]
          %v524 = vld [vmem:[#allocation2 + $0x40] sm:$0xff]
          %v525 = vld [vmem:[#allocation2 + $0x48] sm:$0xff]
          %v526 = vld [vmem:[#allocation2 + $0x50] sm:$0xff]
          %v527 = vld [vmem:[#allocation2 + $0x58] sm:$0xff]
          %v528 = vld [vmem:[#allocation2 + $0x60] sm:$0xff]
          %v529 = vld [vmem:[#allocation2 + $0x68] sm:$0xff]
          %v530 = vld [vmem:[#allocation2 + $0x70] sm:$0xff]
          %v531 = vld [vmem:[#allocation2 + $0x78] sm:$0xff]
          %v532 = vld [vmem:[%s2] sm:$0x1]
          %v534 = vperm.slane %v532, 0
          %v536 = vadd.f32 %v516, %v534
          %v537 = vadd.f32 %v517, %v534
          %v538 = vadd.f32 %v518, %v534
          %v539 = vadd.f32 %v519, %v534
          %v540 = vadd.f32 %v520, %v534
          %v541 = vadd.f32 %v521, %v534
          %v542 = vadd.f32 %v522, %v534
          %v543 = vadd.f32 %v523, %v534
          %v544 = vadd.f32 %v524, %v534
          %v545 = vadd.f32 %v525, %v534
          %v546 = vadd.f32 %v526, %v534
          %v547 = vadd.f32 %v527, %v534
          %v548 = vadd.f32 %v528, %v534
          %v549 = vadd.f32 %v529, %v534
          %v550 = vadd.f32 %v530, %v534
          %v551 = vadd.f32 %v531, %v534
          %552 = vst [vmem:[%s305] sm:$0xff] %v536
          %553 = vst [vmem:[%s305 + $0x8] sm:$0xff] %v537
          %554 = vst [vmem:[%s305 + $0x10] sm:$0xff] %v538
          %555 = vst [vmem:[%s305 + $0x18] sm:$0xff] %v539
          %556 = vst [vmem:[%s305 + $0x20] sm:$0xff] %v540
          %557 = vst [vmem:[%s305 + $0x28] sm:$0xff] %v541
          %558 = vst [vmem:[%s305 + $0x30] sm:$0xff] %v542
          %559 = vst [vmem:[%s305 + $0x38] sm:$0xff] %v543
          %560 = vst [vmem:[%s305 + $0x40] sm:$0xff] %v544
          %561 = vst [vmem:[%s305 + $0x48] sm:$0xff] %v545
          %562 = vst [vmem:[%s305 + $0x50] sm:$0xff] %v546
          %563 = vst [vmem:[%s305 + $0x58] sm:$0xff] %v547
          %564 = vst [vmem:[%s305 + $0x60] sm:$0xff] %v548
          %565 = vst [vmem:[%s305 + $0x68] sm:$0xff] %v549
          %566 = vst [vmem:[%s305 + $0x70] sm:$0xff] %v550
          %567 = vst [vmem:[%s305 + $0x78] sm:$0xff] %v551
        $region78: #{ifgcn_forward.3} parent=65 // pred_fallthru
          _
        %s568 = smul.u32 16, %s18
        %p569 = scmp.lt.s32.totalorder %s568, 31
        %s570 = scalar_select %p569, %s568, 31
        %s571 = smul.addr %s570, 8
        %s572 = scalar_lea.vmem %s3, %s571
        // Predicated region
        $region79: #{ifgcn_forward.3} parent=65 // pred_check
          %p573 = pneg %p119
        $region80: #{ifgcn_forward.3} parent=65 // pred_check_branch
          %575 = sbr.rel (%p573) target = $region82
        $region81: #{ifgcn_forward.3} parent=65 // pred_region
          %s576 = smul.u32 16, %s18
        $region82: #{ifgcn_forward.3} parent=65 // pred_fallthru
          _
      $region66: #{ifgcn_forward.3} parent=5 // pred_fallthru
        _
      %p577 = scmp.le.s32.totalorder 2, %s9
      // Predicated region
      $region83: #{ifgcn_forward.3} parent=5 // pred_check
        %p578 = pneg %p577
      $region84: #{ifgcn_forward.3} parent=5 // pred_check_branch
        %580 = sbr.rel (%p578) target = $region86
      $region85: #{ifgcn_forward.3} parent=5 // pred_region
        %s581 = ssub.s32 %s9, 2
        // Predicated region
        $region87: #{ifgcn_forward.3} parent=85 // pred_check
          %p582 = pneg %p125
        $region88: #{ifgcn_forward.3} parent=85 // pred_check_branch
          %584 = sbr.rel (%p582) target = $region90
        $region89: #{ifgcn_forward.3} parent=85 // pred_region
          %s585 = smul.u32 16, %s20
          %p586 = scmp.lt.s32.totalorder %s585, 31
          %s587 = scalar_select %p586, %s585, 31
          %s588 = smul.addr %s587, 8
          %s589 = scalar_lea.vmem %s3, %s588
        $region90: #{ifgcn_forward.3} parent=85 // pred_fallthru
          _
      $region86: #{ifgcn_forward.3} parent=5 // pred_fallthru
        _
    $region6: #{ifgcn_forward.3} parent=1 // loop_footer
      %s13 = sadd.s32 1, %s9
    $region7: #{ifgcn_forward.3} parent=1 // loop_footer_branch
      %8 = sbr.rel target = $region3
    $region8: #{ifgcn_forward.3} parent=1 // loop_exit
      _

</llo_original>
